<compile_context>
chip_gen: v5e
topology: v5e:2x2
jax: 0.10.0
libtpu: 0.0.40
codegen_flags: <defaults>
</compile_context>

<pallas_src>
import functools

import jax
import jax.numpy as jnp
from jax.experimental import pallas as pl
from jax.experimental.pallas import tpu as pltpu


def fire_kernel(x_ref, ws_ref, bs_ref, wexp_ref, bexp_ref, mask_ref, out_ref,
                *, W, HWp):
    """One grid step: B images, channel-major (C, lane) layout.

    x_ref:    (B, Cin, HWp)        native input dtype (cast in-kernel)
    ws_ref:   (S, Cin)             squeeze 1x1 weight, compute dtype
    bs_ref:   (S, 1)       f32
    wexp_ref: (E1+E3, 9*S)         fused expand weight: rows [0,E1) hold the
                                   1x1 weight in the center-tap K block
                                   (cols [4S,5S)), rows [E1,E1+E3) hold the
                                   tap-major 3x3 weight.
    bexp_ref: (E1+E3, 1)   f32     concat([b1, b3])
    mask_ref: (9, 1, B*HWp)        0/1 boundary+pad validity per tap, compute dtype
    out_ref:  (B, E1+E3, HWp)      fused output (o1 channels then o3 channels)
    """
    B = x_ref.shape[0]
    cdt = ws_ref.dtype

    ws = ws_ref[...]
    bs = bs_ref[...]
    wexp = wexp_ref[...]
    bexp = bexp_ref[...]
    masks = mask_ref[...]                       # (9, 1, B*HWp)

    # ---- squeeze 1x1 + ReLU per image, laid side-by-side along the lane ----
    s_parts = []
    for b in range(B):
        xb = x_ref[b].astype(cdt)               # (Cin, HWp)
        sb = jnp.dot(ws, xb, preferred_element_type=jnp.float32) + bs
        s_parts.append(jnp.maximum(sb, 0.0).astype(cdt))
    s_all = s_parts[0] if B == 1 else jnp.concatenate(s_parts, axis=1)
    Ntot = B * HWp                              # s_all: (S, Ntot)

    # ---- build the K-stacked tap slab (9*S, Ntot) via lane rolls + masks ----
    taps = []
    for k in range(9):
        dy, dx = divmod(k, 3)
        off = (dy - 1) * W + (dx - 1)
        if off == 0:
            taps.append(s_all)                  # center tap: no shift, no mask
        else:
            t = pltpu.roll(s_all, (-off) % Ntot, axis=1) * masks[k]
            taps.append(t.astype(cdt))
    stack = jnp.concatenate(taps, axis=0)       # (9*S, Ntot)

    # ---- single fused expand matmul + bias + ReLU (o1 rows then o3 rows) ----
    o = jnp.dot(wexp, stack, preferred_element_type=jnp.float32) + bexp
    o = jnp.maximum(o, 0.0).astype(out_ref.dtype)   # (E1+E3, Ntot)

    for b in range(B):
        out_ref[b] = o[:, b * HWp:(b + 1) * HWp]


def _pick_batch_block(n, per_image_bytes, budget_bytes=40 * 1024 * 1024):
    """Largest divisor of n fitting the VMEM budget, keeping >=2 grid steps."""
    best = 1
    for cand in range(1, n + 1):
        if n % cand:
            continue
        if n >= 2 and n // cand < 2:      # keep >=2 steps: v7x dual-TC + pipelining
            continue
        if cand * per_image_bytes <= budget_bytes:
            best = max(best, cand)
    return best


def fire_forward(x_nchw, ws, bs, w1, b1, w3, b3,
                 *, compute_dtype=None, out_dtype=None, batch_block=None):
    """Fire forward. x_nchw: (N, Cin, H, W) -> (N, E1+E3, H, W).

    Weight layouts (match PyTorch conv weights):
      ws: (S, Cin)   bs: (S,)
      w1: (E1, S)    b1: (E1,)
      w3: (3, 3, E3, S)  == torch e3x3.weight.permute(2, 3, 0, 1)   b3: (E3,)
    """
    N, Cin, H, W = x_nchw.shape
    S = ws.shape[0]
    E1 = w1.shape[0]
    E3 = w3.shape[2]
    HW = H * W
    HWp = ((HW + 127) // 128) * 128          # lane-pad to multiple of 128
    assert W + 1 < HW, "image too small for seam-safe batched rolls"

    if compute_dtype is None:
        compute_dtype = x_nchw.dtype
    if out_dtype is None:
        out_dtype = x_nchw.dtype

    # Free reshape (no transpose); x stays in its NATIVE dtype -- the compute
    # dtype cast happens in-kernel, avoiding an extra wrapper-side HBM pass.
    x = x_nchw.reshape(N, Cin, HW)
    if HWp != HW:
        x = jnp.pad(x, ((0, 0), (0, 0), (0, HWp - HW)))

    # Batch block sizing against VMEM (double-buffered in/out blocks + the
    # in-kernel squeeze / tap-stack slabs), keeping >=2 grid steps.
    xb = jnp.dtype(x.dtype).itemsize
    ob = jnp.dtype(out_dtype).itemsize
    cb = jnp.dtype(compute_dtype).itemsize
    per_img = HWp * (2 * Cin * xb + 2 * (E1 + E3) * ob
                     + 10 * S * cb + (E1 + E3) * 4 + 9 * cb)
    if batch_block is None:
        batch_block = _pick_batch_block(N, per_img)
    assert N % batch_block == 0
    B = batch_block
    Ntot = B * HWp

    # ---- weight packing (tiny, one-time) ----
    wsc = ws.astype(compute_dtype)
    bs2 = bs.reshape(S, 1).astype(jnp.float32)
    # tap-major 3x3 weight: (E3, 9*S), column block k = tap (dy, dx) = divmod(k,3)
    w3s = jnp.transpose(w3, (2, 0, 1, 3)).reshape(E3, 9 * S)
    # fused expand weight: 1x1 weight lives in the center-tap K block.
    w1blk = jnp.zeros((E1, 9 * S), w1.dtype).at[:, 4 * S:5 * S].set(w1)
    wexp = jnp.concatenate([w1blk, w3s], axis=0).astype(compute_dtype)
    bexp = jnp.concatenate([b1, b3]).reshape(E1 + E3, 1).astype(jnp.float32)

    # ---- 0/1 validity masks for the 9 taps (boundary + pad columns), tiled
    # per image along the folded lane axis, pre-cast to the compute dtype ----
    rows = jnp.arange(H)
    cols = jnp.arange(W)
    mlist = []
    for dy in range(3):
        for dx in range(3):
            rm = (rows + dy - 1 >= 0) & (rows + dy - 1 < H)
            cm = (cols + dx - 1 >= 0) & (cols + dx - 1 < W)
            m = (rm[:, None] & cm[None, :]).reshape(HW)
            m = jnp.pad(m, (0, HWp - HW))            # zero the pad columns
            mlist.append(jnp.tile(m, B))             # (B*HWp,)
    mask9 = jnp.stack(mlist, axis=0).astype(compute_dtype).reshape(9, 1, Ntot)

    kernel = functools.partial(fire_kernel, W=W, HWp=HWp)

    out = pl.pallas_call(
        kernel,
        out_shape=jax.ShapeDtypeStruct((N, E1 + E3, HWp), out_dtype),
        grid_spec=pltpu.PrefetchScalarGridSpec(
            num_scalar_prefetch=0,
            grid=(N // B,),
            in_specs=[
                pl.BlockSpec((B, Cin, HWp), lambda n: (n, 0, 0)),
                pl.BlockSpec((S, Cin), lambda n: (0, 0)),
                pl.BlockSpec((S, 1), lambda n: (0, 0)),
                pl.BlockSpec((E1 + E3, 9 * S), lambda n: (0, 0)),
                pl.BlockSpec((E1 + E3, 1), lambda n: (0, 0)),
                pl.BlockSpec((9, 1, Ntot), lambda n: (0, 0, 0)),
            ],
            out_specs=pl.BlockSpec((B, E1 + E3, HWp), lambda n: (n, 0, 0)),
        ),
        compiler_params=pltpu.CompilerParams(
            # Batch axis is fully independent -> shard across v7x's 2 TCs.
            dimension_semantics=("parallel",),
            # Above the 16/32 MiB scoped defaults, within 64 MiB v7x physical.
            vmem_limit_bytes=64 * 1024 * 1024,
        ),
    )(x, wsc, bs2, wexp, bexp, mask9)

    if HWp != HW:
        out = out[:, :, :HW]
    return out.reshape(N, E1 + E3, H, W)


def fire_reference(x_nchw, ws, bs, w1, b1, w3, b3):
    """Plain-JAX f32 reference (same weight layout, same math)."""
    x = x_nchw.astype(jnp.float32)
    N, Cin, H, W = x.shape
    E3 = w3.shape[2]
    s = jnp.einsum('sc,nchw->nshw', ws, x) + bs[None, :, None, None]
    s = jnp.maximum(s, 0.0)
    o1 = jnp.einsum('es,nshw->nehw', w1, s) + b1[None, :, None, None]
    o1 = jnp.maximum(o1, 0.0)
    sp = jnp.pad(s, ((0, 0), (0, 0), (1, 1), (1, 1)))
    o3 = jnp.zeros((N, E3, H, W), jnp.float32) + b3[None, :, None, None]
    for dy in range(3):
        for dx in range(3):
            o3 = o3 + jnp.einsum('es,nshw->nehw', w3[dy, dx],
                                 sp[:, :, dy:dy + H, dx:dx + W])
    o3 = jnp.maximum(o3, 0.0)
    return jnp.concatenate([o1, o3], axis=1)


if __name__ == "__main__":
    # Fire(in_planes=4, s1x1_planes=8, e1x1_planes=8, e3x3_planes=8)
    N, Cin, H, W = 2, 4, 16, 16
    S, E1, E3 = 8, 8, 8

    key = jax.random.PRNGKey(0)
    kx, k0, k1, k2, k3, k4, k5 = jax.random.split(key, 7)

    x = jax.random.normal(kx, (N, Cin, H, W), jnp.float32)
    ws = jax.random.normal(k0, (S, Cin), jnp.float32) * 0.2
    bs = jax.random.normal(k1, (S,), jnp.float32) * 0.1
    w1 = jax.random.normal(k2, (E1, S), jnp.float32) * 0.2
    b1 = jax.random.normal(k3, (E1,), jnp.float32) * 0.1
    w3 = jax.random.normal(k4, (3, 3, E3, S), jnp.float32) * 0.2
    b3 = jax.random.normal(k5, (E3,), jnp.float32) * 0.1

    ref = fire_reference(x, ws, bs, w1, b1, w3, b3)

    # f32 path (batch block auto-picked -> B=1, grid=2 for dual-TC sharding).
    out = jax.block_until_ready(jax.jit(fire_forward)(x, ws, bs, w1, b1, w3, b3))
    assert out.shape == (N, E1 + E3, H, W), out.shape
    assert jnp.allclose(out, ref, rtol=1e-2, atol=1e-2), "f32 kernel mismatch"

    # Batch-folded path (B=2 in one grid step) -- exercises lane-folded images,
    # seam-masked rolls and per-image output slices.
    fwd_b2 = jax.jit(functools.partial(fire_forward, batch_block=2))
    out_b2 = jax.block_until_ready(fwd_b2(x, ws, bs, w1, b1, w3, b3))
    assert jnp.allclose(out_b2, ref, rtol=1e-2, atol=1e-2), "batch-fold mismatch"

    # bf16-compute + bf16-output path (f32 accumulation) -- perf mode on v6e/v7x.
    fwd_bf16 = jax.jit(functools.partial(fire_forward,
                                         compute_dtype=jnp.bfloat16,
                                         out_dtype=jnp.bfloat16))
    out_bf16 = jax.block_until_ready(fwd_bf16(x, ws, bs, w1, b1, w3, b3))
    assert out_bf16.shape == (N, E1 + E3, H, W), out_bf16.shape
    assert jnp.allclose(out_bf16.astype(jnp.float32), ref,
                        rtol=1e-1, atol=1e-1), "bf16 mismatch"

    print("KERNEL_OK")
</pallas_src>

<mosaic_0001>
module attributes {stable_mosaic.version = 11 : i64} {
  func.func @fire_kernel(%arg0: i32, %arg1: memref<1x4x256xf32, #tpu.memory_space<vmem>>, %arg2: memref<8x4xf32, #tpu.memory_space<vmem>>, %arg3: memref<8x1xf32, #tpu.memory_space<vmem>>, %arg4: memref<16x72xf32, #tpu.memory_space<vmem>>, %arg5: memref<16x1xf32, #tpu.memory_space<vmem>>, %arg6: memref<9x1x256xf32, #tpu.memory_space<vmem>>, %arg7: memref<1x16x256xf32, #tpu.memory_space<vmem>>) attributes {dimension_semantics = [#tpu.dimension_semantics<parallel>], iteration_bounds = array<i64: 2>, scalar_prefetch = 0 : i64, scratch_operands = 0 : i64, tpu.core_type = #tpu.core_type<tc>, window_params = [{transform_indices = @transform_0, window_bounds = array<i64: 1, 4, 256>}, {pipeline_mode = #tpu.pipeline_mode<synchronous>, transform_indices = @transform_1, window_bounds = array<i64: 8, 4>}, {pipeline_mode = #tpu.pipeline_mode<synchronous>, transform_indices = @transform_2, window_bounds = array<i64: 8, 1>}, {pipeline_mode = #tpu.pipeline_mode<synchronous>, transform_indices = @transform_3, window_bounds = array<i64: 16, 72>}, {pipeline_mode = #tpu.pipeline_mode<synchronous>, transform_indices = @transform_4, window_bounds = array<i64: 16, 1>}, {pipeline_mode = #tpu.pipeline_mode<synchronous>, transform_indices = @transform_5, window_bounds = array<i64: 9, 1, 256>}, {transform_indices = @transform_6, window_bounds = array<i64: 1, 16, 256>}]} {
    %c0 = arith.constant 0 : index
    %c0_0 = arith.constant 0 : index
    %0 = vector.load %arg2[%c0, %c0_0] : memref<8x4xf32, #tpu.memory_space<vmem>>, vector<8x4xf32>
    %c0_1 = arith.constant 0 : index
    %c0_2 = arith.constant 0 : index
    %1 = vector.load %arg3[%c0_1, %c0_2] : memref<8x1xf32, #tpu.memory_space<vmem>>, vector<8x1xf32>
    %c0_3 = arith.constant 0 : index
    %c0_4 = arith.constant 0 : index
    %2 = vector.load %arg4[%c0_3, %c0_4] : memref<16x72xf32, #tpu.memory_space<vmem>>, vector<16x72xf32>
    %c0_5 = arith.constant 0 : index
    %c0_6 = arith.constant 0 : index
    %3 = vector.load %arg5[%c0_5, %c0_6] : memref<16x1xf32, #tpu.memory_space<vmem>>, vector<16x1xf32>
    %c0_7 = arith.constant 0 : index
    %c0_8 = arith.constant 0 : index
    %c0_9 = arith.constant 0 : index
    %4 = vector.load %arg6[%c0_7, %c0_8, %c0_9] : memref<9x1x256xf32, #tpu.memory_space<vmem>>, vector<9x1x256xf32>
    %c0_10 = arith.constant 0 : index
    %c0_11 = arith.constant 0 : index
    %c0_12 = arith.constant 0 : index
    %5 = vector.load %arg1[%c0_10, %c0_11, %c0_12] : memref<1x4x256xf32, #tpu.memory_space<vmem>>, vector<1x4x256xf32>
    %6 = vector.shape_cast %5 : vector<1x4x256xf32> to vector<4x256xf32>
    %cst = arith.constant dense<0.000000e+00> : vector<8x256xf32>
    %7 = tpu.matmul %0, %6, %cst {dimension_numbers = #tpu.dot_dimension_numbers<[1], [0], [0], [1], [0, 0, 1, 1], [], []>} : vector<8x4xf32>, vector<4x256xf32>, vector<8x256xf32> -> vector<8x256xf32>
    %8 = vector.broadcast %1 : vector<8x1xf32> to vector<8x256xf32>
    %9 = arith.addf %7, %8 : vector<8x256xf32>
    %cst_13 = arith.constant 0.000000e+00 : f32
    %10 = vector.broadcast %cst_13 : f32 to vector<8x256xf32>
    %11 = arith.maximumf %9, %10 : vector<8x256xf32>
    %c17_i32 = arith.constant 17 : i32
    %12 = tpu.dynamic_rotate %11 by %c17_i32 dim 1 : vector<8x256xf32>, i32 -> vector<8x256xf32>
    %13 = vector.extract_strided_slice %4 {offsets = [0, 0, 0], sizes = [1, 1, 256], strides = [1, 1, 1]} : vector<9x1x256xf32> to vector<1x1x256xf32>
    %14 = vector.shape_cast %13 : vector<1x1x256xf32> to vector<1x256xf32>
    %15 = vector.broadcast %14 : vector<1x256xf32> to vector<8x256xf32>
    %16 = arith.mulf %12, %15 : vector<8x256xf32>
    %c16_i32 = arith.constant 16 : i32
    %17 = tpu.dynamic_rotate %11 by %c16_i32 dim 1 : vector<8x256xf32>, i32 -> vector<8x256xf32>
    %18 = vector.extract_strided_slice %4 {offsets = [1, 0, 0], sizes = [1, 1, 256], strides = [1, 1, 1]} : vector<9x1x256xf32> to vector<1x1x256xf32>
    %19 = vector.shape_cast %18 : vector<1x1x256xf32> to vector<1x256xf32>
    %20 = vector.broadcast %19 : vector<1x256xf32> to vector<8x256xf32>
    %21 = arith.mulf %17, %20 : vector<8x256xf32>
    %c15_i32 = arith.constant 15 : i32
    %22 = tpu.dynamic_rotate %11 by %c15_i32 dim 1 : vector<8x256xf32>, i32 -> vector<8x256xf32>
    %23 = vector.extract_strided_slice %4 {offsets = [2, 0, 0], sizes = [1, 1, 256], strides = [1, 1, 1]} : vector<9x1x256xf32> to vector<1x1x256xf32>
    %24 = vector.shape_cast %23 : vector<1x1x256xf32> to vector<1x256xf32>
    %25 = vector.broadcast %24 : vector<1x256xf32> to vector<8x256xf32>
    %26 = arith.mulf %22, %25 : vector<8x256xf32>
    %c1_i32 = arith.constant 1 : i32
    %27 = tpu.dynamic_rotate %11 by %c1_i32 dim 1 : vector<8x256xf32>, i32 -> vector<8x256xf32>
    %28 = vector.extract_strided_slice %4 {offsets = [3, 0, 0], sizes = [1, 1, 256], strides = [1, 1, 1]} : vector<9x1x256xf32> to vector<1x1x256xf32>
    %29 = vector.shape_cast %28 : vector<1x1x256xf32> to vector<1x256xf32>
    %30 = vector.broadcast %29 : vector<1x256xf32> to vector<8x256xf32>
    %31 = arith.mulf %27, %30 : vector<8x256xf32>
    %c255_i32 = arith.constant 255 : i32
    %32 = tpu.dynamic_rotate %11 by %c255_i32 dim 1 : vector<8x256xf32>, i32 -> vector<8x256xf32>
    %33 = vector.extract_strided_slice %4 {offsets = [5, 0, 0], sizes = [1, 1, 256], strides = [1, 1, 1]} : vector<9x1x256xf32> to vector<1x1x256xf32>
    %34 = vector.shape_cast %33 : vector<1x1x256xf32> to vector<1x256xf32>
    %35 = vector.broadcast %34 : vector<1x256xf32> to vector<8x256xf32>
    %36 = arith.mulf %32, %35 : vector<8x256xf32>
    %c241_i32 = arith.constant 241 : i32
    %37 = tpu.dynamic_rotate %11 by %c241_i32 dim 1 : vector<8x256xf32>, i32 -> vector<8x256xf32>
    %38 = vector.extract_strided_slice %4 {offsets = [6, 0, 0], sizes = [1, 1, 256], strides = [1, 1, 1]} : vector<9x1x256xf32> to vector<1x1x256xf32>
    %39 = vector.shape_cast %38 : vector<1x1x256xf32> to vector<1x256xf32>
    %40 = vector.broadcast %39 : vector<1x256xf32> to vector<8x256xf32>
    %41 = arith.mulf %37, %40 : vector<8x256xf32>
    %c240_i32 = arith.constant 240 : i32
    %42 = tpu.dynamic_rotate %11 by %c240_i32 dim 1 : vector<8x256xf32>, i32 -> vector<8x256xf32>
    %43 = vector.extract_strided_slice %4 {offsets = [7, 0, 0], sizes = [1, 1, 256], strides = [1, 1, 1]} : vector<9x1x256xf32> to vector<1x1x256xf32>
    %44 = vector.shape_cast %43 : vector<1x1x256xf32> to vector<1x256xf32>
    %45 = vector.broadcast %44 : vector<1x256xf32> to vector<8x256xf32>
    %46 = arith.mulf %42, %45 : vector<8x256xf32>
    %c239_i32 = arith.constant 239 : i32
    %47 = tpu.dynamic_rotate %11 by %c239_i32 dim 1 : vector<8x256xf32>, i32 -> vector<8x256xf32>
    %48 = vector.extract_strided_slice %4 {offsets = [8, 0, 0], sizes = [1, 1, 256], strides = [1, 1, 1]} : vector<9x1x256xf32> to vector<1x1x256xf32>
    %49 = vector.shape_cast %48 : vector<1x1x256xf32> to vector<1x256xf32>
    %50 = vector.broadcast %49 : vector<1x256xf32> to vector<8x256xf32>
    %51 = arith.mulf %47, %50 : vector<8x256xf32>
    %52 = tpu.concatenate %16, %21, %26, %31, %11, %36, %41, %46, %51 in 0 : vector<8x256xf32>, vector<8x256xf32>, vector<8x256xf32>, vector<8x256xf32>, vector<8x256xf32>, vector<8x256xf32>, vector<8x256xf32>, vector<8x256xf32>, vector<8x256xf32> -> vector<72x256xf32>
    %cst_14 = arith.constant dense<0.000000e+00> : vector<16x256xf32>
    %53 = tpu.matmul %2, %52, %cst_14 {dimension_numbers = #tpu.dot_dimension_numbers<[1], [0], [0], [1], [0, 0, 1, 1], [], []>} : vector<16x72xf32>, vector<72x256xf32>, vector<16x256xf32> -> vector<16x256xf32>
    %54 = vector.broadcast %3 : vector<16x1xf32> to vector<16x256xf32>
    %55 = arith.addf %53, %54 : vector<16x256xf32>
    %cst_15 = arith.constant 0.000000e+00 : f32
    %56 = vector.broadcast %cst_15 : f32 to vector<16x256xf32>
    %57 = arith.maximumf %55, %56 : vector<16x256xf32>
    %c0_16 = arith.constant 0 : index
    %c0_17 = arith.constant 0 : index
    %c0_18 = arith.constant 0 : index
    %58 = vector.load %arg7[%c0_16, %c0_17, %c0_18] : memref<1x16x256xf32, #tpu.memory_space<vmem>>, vector<1x16x256xf32>
    %59 = vector.shape_cast %58 : vector<1x16x256xf32> to vector<16x256xf32>
    %60 = vector.shape_cast %57 : vector<16x256xf32> to vector<1x16x256xf32>
    tpu.vector_store %arg7[%c0_16, %c0_17, %c0_18], %60 {strides = array<i32>} : memref<1x16x256xf32, #tpu.memory_space<vmem>>, vector<1x16x256xf32>,
    return
  }
  func.func @transform_0(%arg0: i32) -> (i32, i32, i32) {
    %c0_i32 = arith.constant 0 : i32
    %c0_i32_0 = arith.constant 0 : i32
    %c0_i32_1 = arith.constant 0 : i32
    return %arg0, %c0_i32, %c0_i32_0 : i32, i32, i32
  }
  func.func @transform_1(%arg0: i32) -> (i32, i32) {
    %c0_i32 = arith.constant 0 : i32
    %c0_i32_0 = arith.constant 0 : i32
    %c0_i32_1 = arith.constant 0 : i32
    return %c0_i32, %c0_i32_0 : i32, i32
  }
  func.func @transform_2(%arg0: i32) -> (i32, i32) {
    %c0_i32 = arith.constant 0 : i32
    %c0_i32_0 = arith.constant 0 : i32
    %c0_i32_1 = arith.constant 0 : i32
    return %c0_i32, %c0_i32_0 : i32, i32
  }
  func.func @transform_3(%arg0: i32) -> (i32, i32) {
    %c0_i32 = arith.constant 0 : i32
    %c0_i32_0 = arith.constant 0 : i32
    %c0_i32_1 = arith.constant 0 : i32
    return %c0_i32, %c0_i32_0 : i32, i32
  }
  func.func @transform_4(%arg0: i32) -> (i32, i32) {
    %c0_i32 = arith.constant 0 : i32
    %c0_i32_0 = arith.constant 0 : i32
    %c0_i32_1 = arith.constant 0 : i32
    return %c0_i32, %c0_i32_0 : i32, i32
  }
  func.func @transform_5(%arg0: i32) -> (i32, i32, i32) {
    %c0_i32 = arith.constant 0 : i32
    %c0_i32_0 = arith.constant 0 : i32
    %c0_i32_1 = arith.constant 0 : i32
    %c0_i32_2 = arith.constant 0 : i32
    return %c0_i32, %c0_i32_0, %c0_i32_1 : i32, i32, i32
  }
  func.func @transform_6(%arg0: i32) -> (i32, i32, i32) {
    %c0_i32 = arith.constant 0 : i32
    %c0_i32_0 = arith.constant 0 : i32
    %c0_i32_1 = arith.constant 0 : i32
    return %arg0, %c0_i32, %c0_i32_0 : i32, i32, i32
  }
}

</mosaic_0001>

<llo_original>
// kernel: fire_forward.1
$region0: #{fire_forward.1}
  #allocation0 [shape = 'u32[]', space=smem, size = 0x4, offset = 0x4, fixed_abs, tag = 'smem constant byte address 0x4 - core index']
  #allocation1 [shape = 'u32[72,128]{1,0:T(1,128)}', space=vmem, size = 0x9000, scoped, tag = 'internal scratch']
  %s0 = inlined_call_operand.vmem [shape: f32[2,4,256], index: 0, kind: input, shape index: {}]
  %s1 = inlined_call_operand.vmem [shape: f32[8,4], index: 1, kind: input, shape index: {}]
  %s2 = inlined_call_operand.vmem [shape: f32[8,1], index: 2, kind: input, shape index: {}]
  %s3 = inlined_call_operand.vmem [shape: f32[16,72], index: 3, kind: input, shape index: {}]
  %s4 = inlined_call_operand.vmem [shape: f32[16,1], index: 4, kind: input, shape index: {}]
  %s5 = inlined_call_operand.vmem [shape: f32[9,1,256], index: 5, kind: input, shape index: {}]
  %s6 = inlined_call_operand.vmem [shape: f32[2,16,256], index: 6, kind: output, shape index: {}]
  %s7 = sld [smem:[#allocation0]]
  $region57: #{fire_forward.1} parent=0
    _
  %s9 = ssub.s32 1, %s7
  %s10 = scalar_select 0, %s9, %s7
  loop: start=0, step=1, limit=4
  $region2: #{fire_forward.1} parent=0 // loop_pre_header
    _
  $region3: #{fire_forward.1} parent=0 // loop_header
    %s12 = sphi 0, %s16
    %p13 = scmp.ge.s32.totalorder %s12, 4
    %s22 = sphi 0, %s24
    %s25 = sphi 0, %s22
    %s26 = sphi 0, %s25
    %s42 = sphi 0, %s26
    %s46 = sphi 0, %s46
    %s48 = sphi 0, %s46
    %s49 = sphi 0, %s48
    %s63 = sphi 0, %s49
    %s67 = sphi 0, %s67
    %s69 = sphi 0, %s67
    %s70 = sphi 0, %s69
    %s84 = sphi 0, %s70
    %s88 = sphi 0, %s88
    %s90 = sphi 0, %s88
    %s91 = sphi 0, %s90
    %s105 = sphi 0, %s91
    %s109 = sphi 0, %s109
    %s111 = sphi 0, %s109
    %s112 = sphi 0, %s111
    %s126 = sphi 0, %s112
    %s130 = sphi 0, %s130
    %s132 = sphi 0, %s130
    %s133 = sphi 0, %s132
    %s147 = sphi 0, %s133
    %s153 = sphi 0, %s155
    %s156 = sphi 0, %s153
    %s157 = sphi 0, %s156
    %s173 = sphi 0, %s157
  $region4: #{fire_forward.1} parent=0 // loop_header_branch
    %15 = sbr.rel (%p13) target = $region8
  $region5: #{fire_forward.1} parent=0 // loop_body
    %s17 = ssub.s32 %s12, 1
    %s18 = ssub.s32 %s12, 2
    %s19 = sadd.s32 %s12, 1
    %s20 = ssub.s32 %s12, %s19
    %p21 = scmp.eq.s32.totalorder %s20, 0
    %s23 = sadd.s32 %s22, 1
    %s24 = scalar_select %p21, %s22, %s23
    %p27 = pneg %p21
    %p28 = scmp.eq.s32.totalorder %s12, 1
    %p29 = por %p27, %p28
    %p30 = scmp.ne.s32.totalorder %s22, %s25
    %p31 = scmp.eq.s32.totalorder %s12, 0
    %p32 = por %p30, %p31
    %p33 = scmp.ne.s32.totalorder %s22, %s25
    %p34 = scmp.eq.s32.totalorder %s17, 1
    %p35 = por %p33, %p34
    %p36 = scmp.ne.s32.totalorder %s25, %s26
    %p37 = scmp.eq.s32.totalorder %s17, 0
    %p38 = por %p36, %p37
    %p39 = scmp.ne.s32.totalorder %s25, %s26
    %p40 = scmp.eq.s32.totalorder %s18, 1
    %p41 = por %p39, %p40
    %p43 = scmp.ne.s32.totalorder %s26, %s42
    %p44 = scmp.eq.s32.totalorder %s18, 0
    %p45 = por %p43, %p44
    %s47 = sadd.s32 %s46, 1
    %p50 = scmp.eq.s32.totalorder %s12, 1
    %p51 = scmp.ne.s32.totalorder %s46, %s48
    %p52 = scmp.eq.s32.totalorder %s12, 0
    %p53 = por %p51, %p52
    %p54 = scmp.ne.s32.totalorder %s46, %s48
    %p55 = scmp.eq.s32.totalorder %s17, 1
    %p56 = por %p54, %p55
    %p57 = scmp.ne.s32.totalorder %s48, %s49
    %p58 = scmp.eq.s32.totalorder %s17, 0
    %p59 = por %p57, %p58
    %p60 = scmp.ne.s32.totalorder %s48, %s49
    %p61 = scmp.eq.s32.totalorder %s18, 1
    %p62 = por %p60, %p61
    %p64 = scmp.ne.s32.totalorder %s49, %s63
    %p65 = scmp.eq.s32.totalorder %s18, 0
    %p66 = por %p64, %p65
    %s68 = sadd.s32 %s67, 1
    %p71 = scmp.eq.s32.totalorder %s12, 1
    %p72 = scmp.ne.s32.totalorder %s67, %s69
    %p73 = scmp.eq.s32.totalorder %s12, 0
    %p74 = por %p72, %p73
    %p75 = scmp.ne.s32.totalorder %s67, %s69
    %p76 = scmp.eq.s32.totalorder %s17, 1
    %p77 = por %p75, %p76
    %p78 = scmp.ne.s32.totalorder %s69, %s70
    %p79 = scmp.eq.s32.totalorder %s17, 0
    %p80 = por %p78, %p79
    %p81 = scmp.ne.s32.totalorder %s69, %s70
    %p82 = scmp.eq.s32.totalorder %s18, 1
    %p83 = por %p81, %p82
    %p85 = scmp.ne.s32.totalorder %s70, %s84
    %p86 = scmp.eq.s32.totalorder %s18, 0
    %p87 = por %p85, %p86
    %s89 = sadd.s32 %s88, 1
    %p92 = scmp.eq.s32.totalorder %s12, 1
    %p93 = scmp.ne.s32.totalorder %s88, %s90
    %p94 = scmp.eq.s32.totalorder %s12, 0
    %p95 = por %p93, %p94
    %p96 = scmp.ne.s32.totalorder %s88, %s90
    %p97 = scmp.eq.s32.totalorder %s17, 1
    %p98 = por %p96, %p97
    %p99 = scmp.ne.s32.totalorder %s90, %s91
    %p100 = scmp.eq.s32.totalorder %s17, 0
    %p101 = por %p99, %p100
    %p102 = scmp.ne.s32.totalorder %s90, %s91
    %p103 = scmp.eq.s32.totalorder %s18, 1
    %p104 = por %p102, %p103
    %p106 = scmp.ne.s32.totalorder %s91, %s105
    %p107 = scmp.eq.s32.totalorder %s18, 0
    %p108 = por %p106, %p107
    %s110 = sadd.s32 %s109, 1
    %p113 = scmp.eq.s32.totalorder %s12, 1
    %p114 = scmp.ne.s32.totalorder %s109, %s111
    %p115 = scmp.eq.s32.totalorder %s12, 0
    %p116 = por %p114, %p115
    %p117 = scmp.ne.s32.totalorder %s109, %s111
    %p118 = scmp.eq.s32.totalorder %s17, 1
    %p119 = por %p117, %p118
    %p120 = scmp.ne.s32.totalorder %s111, %s112
    %p121 = scmp.eq.s32.totalorder %s17, 0
    %p122 = por %p120, %p121
    %p123 = scmp.ne.s32.totalorder %s111, %s112
    %p124 = scmp.eq.s32.totalorder %s18, 1
    %p125 = por %p123, %p124
    %p127 = scmp.ne.s32.totalorder %s112, %s126
    %p128 = scmp.eq.s32.totalorder %s18, 0
    %p129 = por %p127, %p128
    %s131 = sadd.s32 %s130, 1
    %p134 = scmp.eq.s32.totalorder %s12, 1
    %p135 = scmp.ne.s32.totalorder %s130, %s132
    %p136 = scmp.eq.s32.totalorder %s12, 0
    %p137 = por %p135, %p136
    %p138 = scmp.ne.s32.totalorder %s130, %s132
    %p139 = scmp.eq.s32.totalorder %s17, 1
    %p140 = por %p138, %p139
    %p141 = scmp.ne.s32.totalorder %s132, %s133
    %p142 = scmp.eq.s32.totalorder %s17, 0
    %p143 = por %p141, %p142
    %p144 = scmp.ne.s32.totalorder %s132, %s133
    %p145 = scmp.eq.s32.totalorder %s18, 1
    %p146 = por %p144, %p145
    %p148 = scmp.ne.s32.totalorder %s133, %s147
    %p149 = scmp.eq.s32.totalorder %s18, 0
    %p150 = por %p148, %p149
    %s151 = ssub.s32 %s12, %s19
    %p152 = scmp.eq.s32.totalorder %s151, 0
    %s154 = sadd.s32 %s153, 1
    %s155 = scalar_select %p152, %s153, %s154
    %p158 = pneg %p152
    %p159 = scmp.eq.s32.totalorder %s12, 1
    %p160 = por %p158, %p159
    %p161 = scmp.ne.s32.totalorder %s153, %s156
    %p162 = scmp.eq.s32.totalorder %s12, 0
    %p163 = por %p161, %p162
    %p164 = scmp.ne.s32.totalorder %s153, %s156
    %p165 = scmp.eq.s32.totalorder %s17, 1
    %p166 = por %p164, %p165
    %p167 = scmp.ne.s32.totalorder %s156, %s157
    %p168 = scmp.eq.s32.totalorder %s17, 0
    %p169 = por %p167, %p168
    %p170 = scmp.ne.s32.totalorder %s156, %s157
    %p171 = scmp.eq.s32.totalorder %s18, 1
    %p172 = por %p170, %p171
    %p174 = scmp.ne.s32.totalorder %s157, %s173
    %p175 = scmp.eq.s32.totalorder %s18, 0
    %p176 = por %p174, %p175
    %p177 = scmp.le.s32.totalorder 1, %s12
    %p178 = scmp.lt.s32.totalorder %s12, 3
    %p179 = pnand %p177, %p178
    %p180 = pneg %p179
    // Predicated region
    $region9: #{fire_forward.1} parent=5 // pred_check
      _
    $region10: #{fire_forward.1} parent=5 // pred_check_branch
      %182 = sbr.rel (%p179) target = $region12
    $region11: #{fire_forward.1} parent=5 // pred_region
      %s183 = ssub.s32 %s12, 1
      // Predicated region
      $region13: #{fire_forward.1} parent=11 // pred_check
        %p184 = pneg %p59
      $region14: #{fire_forward.1} parent=11 // pred_check_branch
        %186 = sbr.rel (%p184) target = $region16
      $region15: #{fire_forward.1} parent=11 // pred_region
        _
      $region16: #{fire_forward.1} parent=11 // pred_fallthru
        _
      // Predicated region
      $region17: #{fire_forward.1} parent=11 // pred_check
        %p187 = pneg %p80
      $region18: #{fire_forward.1} parent=11 // pred_check_branch
        %189 = sbr.rel (%p187) target = $region20
      $region19: #{fire_forward.1} parent=11 // pred_region
        _
      $region20: #{fire_forward.1} parent=11 // pred_fallthru
        _
      // Predicated region
      $region21: #{fire_forward.1} parent=11 // pred_check
        %p190 = pneg %p101
      $region22: #{fire_forward.1} parent=11 // pred_check_branch
        %192 = sbr.rel (%p190) target = $region24
      $region23: #{fire_forward.1} parent=11 // pred_region
        _
      $region24: #{fire_forward.1} parent=11 // pred_fallthru
        _
      // Predicated region
      $region25: #{fire_forward.1} parent=11 // pred_check
        %p193 = pneg %p122
      $region26: #{fire_forward.1} parent=11 // pred_check_branch
        %195 = sbr.rel (%p193) target = $region28
      $region27: #{fire_forward.1} parent=11 // pred_region
        _
      $region28: #{fire_forward.1} parent=11 // pred_fallthru
        _
      // Predicated region
      $region29: #{fire_forward.1} parent=11 // pred_check
        %p196 = pneg %p143
      $region30: #{fire_forward.1} parent=11 // pred_check_branch
        %198 = sbr.rel (%p196) target = $region32
      $region31: #{fire_forward.1} parent=11 // pred_region
        _
      $region32: #{fire_forward.1} parent=11 // pred_fallthru
        _
    $region12: #{fire_forward.1} parent=5 // pred_fallthru
      _
    %p199 = scmp.lt.s32.totalorder %s12, 2
    // Predicated region
    $region33: #{fire_forward.1} parent=5 // pred_check
      %p200 = pneg %p199
    $region34: #{fire_forward.1} parent=5 // pred_check_branch
      %202 = sbr.rel (%p200) target = $region36
    $region35: #{fire_forward.1} parent=5 // pred_region
      // Predicated region
      $region37: #{fire_forward.1} parent=35 // pred_check
        %p203 = pneg %p32
      $region38: #{fire_forward.1} parent=35 // pred_check_branch
        %205 = sbr.rel (%p203) target = $region40
      $region39: #{fire_forward.1} parent=35 // pred_region
        %p206 = scmp.lt.s32.totalorder %s12, 1
        %s207 = scalar_select %p206, %s12, 1
        %s208 = smul.addr %s207, 2
        %s209 = smul.addr %s208, 4
        %s210 = scalar_lea.vmem %s0, %s209
      $region40: #{fire_forward.1} parent=35 // pred_fallthru
        _
    $region36: #{fire_forward.1} parent=5 // pred_fallthru
      _
    %p211 = scmp.le.s32.totalorder 1, %s12
    %p212 = scmp.lt.s32.totalorder %s12, 3
    %p213 = pnand %p211, %p212
    %p214 = pneg %p213
    // Predicated region
    $region41: #{fire_forward.1} parent=5 // pred_check
      _
    $region42: #{fire_forward.1} parent=5 // pred_check_branch
      %216 = sbr.rel (%p213) target = $region44
    $region43: #{fire_forward.1} parent=5 // pred_region
      %s217 = ssub.s32 %s12, 1
      %p218 = scmp.lt.s32.totalorder %s17, 1
      %s219 = scalar_select %p218, %s17, 1
      %s220 = smul.addr %s219, 2
      %s221 = smul.addr %s220, 4
      %s222 = scalar_lea.vmem %s0, %s221
      %p223 = pneg %p38
      %p224 = pneg %p35
      %p225 = pneg %p59
      %p226 = pneg %p56
      %p227 = pneg %p80
      %p228 = pneg %p77
      %p229 = pneg %p101
      %p230 = pneg %p98
      %p231 = pneg %p122
      %p232 = pneg %p119
      %p233 = pneg %p143
      %p234 = pneg %p140
      %p235 = pneg %p169
      %p236 = pneg %p166
      %p237 = scmp.lt.s32.totalorder %s17, 1
      %s238 = scalar_select %p237, %s17, 1
      %s239 = smul.addr %s238, 4
      %s240 = smul.addr %s239, 8
      %s241 = scalar_lea.vmem %s6, %s240
      %p242 = scmp.lt.s32.totalorder %s17, 1
      %s243 = scalar_select %p242, %s17, 1
      %s244 = smul.addr %s243, 2
      %s245 = smul.addr %s244, 4
      %s246 = scalar_lea.vmem %s0, %s245
      %p247 = scmp.lt.s32.totalorder %s17, 1
      %s248 = scalar_select %p247, %s17, 1
      %s249 = smul.addr %s248, 4
      %s250 = smul.addr %s249, 8
      %s251 = scalar_lea.vmem %s6, %s250
      %v252 = vld [vmem:[%s1] sm:$0xff]
      %v253 = vld [vmem:[%s2] sm:$0xff]
      %v254 = vld [vmem:[%s3] sm:$0xff]
      %v255 = vld [vmem:[%s3 + $0x8] sm:$0xff]
      %v256 = vld [vmem:[%s4] sm:$0xff]
      %v257 = vld [vmem:[%s4 + $0x8] sm:$0xff]
      %v258 = vld [vmem:[%s5] sm:$0x3]
      %v259 = vld [vmem:[%s5 + $0x2] sm:$0x3]
      %v260 = vld [vmem:[%s5 + $0x4] sm:$0x3]
      %v261 = vld [vmem:[%s5 + $0x6] sm:$0x3]
      %v262 = vld [vmem:[%s5 + $0xa] sm:$0x3]
      %v263 = vld [vmem:[%s5 + $0xc] sm:$0x3]
      %v264 = vld [vmem:[%s5 + $0xe] sm:$0x3]
      %v265 = vld [vmem:[%s5 + $0x10] sm:$0x3]
      %v266 = vld [vmem:[%s246] sm:$0xff]
      %268 = vset.pattern.permute.xlu0 0
      %269 = vperm.xlu0 %268, %v253
      %v270 = vpop.permute.xlu0 %269
      %273 = vst [vmem:[#allocation1] ss:$2 sm:$0xff] %v266
      %v274 = vld.sshfl [vmem:[#allocation1] sm:$0xff pattern:$0x75316420]
      %v275 = vld.sshfl [vmem:[#allocation1 + $0x8] sm:$0xff pattern:$0x75316420]
      %vm276 = vcmask 31744
      %v278 = vsel %vm276, %v252, 0
      %vm280 = vcmask 1043456
      %v281 = vsel %vm280, %v274, 0
      %v283 = vsel %vm280, %v275, 0
      %285 = vmatpush.msra.mxu0 0.0
      %286 = vmatpush.msra.mxu0 0.0
      %287 = vmatpush.msra.mxu0 0.0
      %288 = vmatpush.msra.mxu0 0.0
      %289 = vmatpush.msra.mxu0 0.0
      %290 = vmatpush.msra.mxu0 0.0
      %291 = vmatpush.msra.mxu0 0.0
      %292 = vmatpush.msra.mxu0 0.0
      %293 = vmatpush.msra.mxu0 0.0
      %294 = vmatpush.msra.mxu0 0.0
      %295 = vmatpush.msra.mxu0 0.0
      %296 = vmatpush.msra.mxu0 0.0
      %297 = vmatpush.msra.mxu0 0.0
      %298 = vmatpush.msra.mxu0 0.0
      %299 = vmatpush.msra.mxu0 0.0
      %300 = vmatpush.msra.mxu0 %v281
      %301 = vmatmul.f32.gmra.mxu0 %v278
      %v302 = vpop.f32.mrf.mxu0
      %v303 = vadd.f32 %v270, %v302
      %304 = vdwg.mxu0
      %305 = vmatpush.msra.mxu0 0.0
      %306 = vmatpush.msra.mxu0 0.0
      %307 = vmatpush.msra.mxu0 0.0
      %308 = vmatpush.msra.mxu0 0.0
      %309 = vmatpush.msra.mxu0 0.0
      %310 = vmatpush.msra.mxu0 0.0
      %311 = vmatpush.msra.mxu0 0.0
      %312 = vmatpush.msra.mxu0 0.0
      %313 = vmatpush.msra.mxu0 0.0
      %314 = vmatpush.msra.mxu0 0.0
      %315 = vmatpush.msra.mxu0 0.0
      %316 = vmatpush.msra.mxu0 0.0
      %317 = vmatpush.msra.mxu0 0.0
      %318 = vmatpush.msra.mxu0 0.0
      %319 = vmatpush.msra.mxu0 0.0
      %320 = vmatpush.msra.mxu0 %v283
      %321 = vmatmul.f32.gmra.mxu0 %v278
      %v322 = vpop.f32.mrf.mxu0
      %v323 = vadd.f32 %v270, %v322
      %324 = vdwg.mxu0
      %v325 = vmax.f32 %v303, 0.0
      %v326 = vmax.f32 %v323, 0.0
      %327 = vrot.lane.b32.xlu0 %v325, 17
      %v328 = vpop.permute.xlu0 %327
      %329 = vrot.lane.b32.xlu0 %v326, 17
      %v330 = vpop.permute.xlu0 %329
      %v331 = vlaneseq
      %v332 = vand.u32 %v331, 127
      %vm333 = vcmp.lt.s32.totalorder %v332, 17
      %v334 = vsel %vm333, %v328, %v330
      %v335 = vsel %vm333, %v330, %v328
      %v337 = vperm.slane %v258, 0
      %v338 = vperm.slane %v258, 1
      %v341 = vmul.f32 %v335, %v337
      %v342 = vmul.f32 %v334, %v338
      %343 = vrot.lane.b32.xlu0 %v325, 16
      %v344 = vpop.permute.xlu0 %343
      %345 = vrot.lane.b32.xlu0 %v326, 16
      %v346 = vpop.permute.xlu0 %345
      %vm347 = vcmp.lt.s32.totalorder %v332, 16
      %v348 = vsel %vm347, %v344, %v346
      %v349 = vsel %vm347, %v346, %v344
      %v351 = vperm.slane %v259, 0
      %v352 = vperm.slane %v259, 1
      %v355 = vmul.f32 %v349, %v351
      %v356 = vmul.f32 %v348, %v352
      %357 = vrot.lane.b32.xlu0 %v325, 15
      %v358 = vpop.permute.xlu0 %357
      %359 = vrot.lane.b32.xlu0 %v326, 15
      %v360 = vpop.permute.xlu0 %359
      %vm361 = vcmp.lt.s32.totalorder %v332, 15
      %v362 = vsel %vm361, %v358, %v360
      %v363 = vsel %vm361, %v360, %v358
      %v365 = vperm.slane %v260, 0
      %v366 = vperm.slane %v260, 1
      %v369 = vmul.f32 %v363, %v365
      %v370 = vmul.f32 %v362, %v366
      %371 = vrot.lane.b32.xlu0 %v325, 1
      %v372 = vpop.permute.xlu0 %371
      %373 = vrot.lane.b32.xlu0 %v326, 1
      %v374 = vpop.permute.xlu0 %373
      %vm375 = vcmp.lt.s32.totalorder %v332, 1
      %v376 = vsel %vm375, %v372, %v374
      %v377 = vsel %vm375, %v374, %v372
      %v379 = vperm.slane %v261, 0
      %v380 = vperm.slane %v261, 1
      %v383 = vmul.f32 %v377, %v379
      %v384 = vmul.f32 %v376, %v380
      %385 = vrot.lane.b32.xlu0 %v325, 127
      %v386 = vpop.permute.xlu0 %385
      %387 = vrot.lane.b32.xlu0 %v326, 127
      %v388 = vpop.permute.xlu0 %387
      %vm389 = vcmp.lt.s32.totalorder %v332, 127
      %v390 = vsel %vm389, %v386, %v388
      %v391 = vsel %vm389, %v388, %v386
      %v393 = vperm.slane %v262, 0
      %v394 = vperm.slane %v262, 1
      %v397 = vmul.f32 %v390, %v393
      %v398 = vmul.f32 %v391, %v394
      %399 = vrot.lane.b32.xlu0 %v325, 113
      %v400 = vpop.permute.xlu0 %399
      %401 = vrot.lane.b32.xlu0 %v326, 113
      %v402 = vpop.permute.xlu0 %401
      %vm403 = vcmp.lt.s32.totalorder %v332, 113
      %v404 = vsel %vm403, %v400, %v402
      %v405 = vsel %vm403, %v402, %v400
      %v407 = vperm.slane %v263, 0
      %v408 = vperm.slane %v263, 1
      %v411 = vmul.f32 %v404, %v407
      %v412 = vmul.f32 %v405, %v408
      %413 = vrot.lane.b32.xlu0 %v325, 112
      %v414 = vpop.permute.xlu0 %413
      %415 = vrot.lane.b32.xlu0 %v326, 112
      %v416 = vpop.permute.xlu0 %415
      %vm417 = vcmp.lt.s32.totalorder %v332, 112
      %v418 = vsel %vm417, %v414, %v416
      %v419 = vsel %vm417, %v416, %v414
      %v421 = vperm.slane %v264, 0
      %v422 = vperm.slane %v264, 1
      %v425 = vmul.f32 %v418, %v421
      %v426 = vmul.f32 %v419, %v422
      %427 = vrot.lane.b32.xlu0 %v325, 111
      %v428 = vpop.permute.xlu0 %427
      %429 = vrot.lane.b32.xlu0 %v326, 111
      %v430 = vpop.permute.xlu0 %429
      %vm431 = vcmp.lt.s32.totalorder %v332, 111
      %v432 = vsel %vm431, %v428, %v430
      %v433 = vsel %vm431, %v430, %v428
      %v435 = vperm.slane %v265, 0
      %v436 = vperm.slane %v265, 1
      %v439 = vmul.f32 %v432, %v435
      %v440 = vmul.f32 %v433, %v436
      %442 = vset.pattern.permute.xlu0 0
      %443 = vperm.xlu0 %442, %v256
      %v444 = vpop.permute.xlu0 %443
      %447 = vset.pattern.permute.xlu0 0
      %448 = vperm.xlu0 %447, %v257
      %v449 = vpop.permute.xlu0 %448
      %vm451 = vcmask 588800
      %v453 = vsel %vm451, %v254, 0
      %v456 = vsel %vm451, %v255, 0
      %458 = vmatpush.msra.mxu0 0.0
      %459 = vmatpush.msra.mxu0 0.0
      %460 = vmatpush.msra.mxu0 0.0
      %461 = vmatpush.msra.mxu0 0.0
      %462 = vmatpush.msra.mxu0 0.0
      %463 = vmatpush.msra.mxu0 0.0
      %464 = vmatpush.msra.mxu0 0.0
      %465 = vmatpush.msra.mxu0 %v439
      %466 = vmatpush.msra.mxu0 %v425
      %467 = vmatpush.msra.mxu0 %v411
      %468 = vmatpush.msra.mxu0 %v397
      %469 = vmatpush.msra.mxu0 %v325
      %470 = vmatpush.msra.mxu0 %v383
      %471 = vmatpush.msra.mxu0 %v369
      %472 = vmatpush.msra.mxu0 %v355
      %473 = vmatpush.msra.mxu0 %v341
      %474 = vmatmul.f32.gmra.mxu0 %v453
      %v475 = vpop.f32.mrf.mxu0
      %v476 = vadd.f32 %v444, %v475
      %477 = vmatmul.f32.gmra.mxu0 %v456
      %v478 = vpop.f32.mrf.mxu0
      %v479 = vadd.f32 %v449, %v478
      %480 = vdwg.mxu0
      %481 = vmatpush.msra.mxu0 0.0
      %482 = vmatpush.msra.mxu0 0.0
      %483 = vmatpush.msra.mxu0 0.0
      %484 = vmatpush.msra.mxu0 0.0
      %485 = vmatpush.msra.mxu0 0.0
      %486 = vmatpush.msra.mxu0 0.0
      %487 = vmatpush.msra.mxu0 0.0
      %488 = vmatpush.msra.mxu0 %v440
      %489 = vmatpush.msra.mxu0 %v426
      %490 = vmatpush.msra.mxu0 %v412
      %491 = vmatpush.msra.mxu0 %v398
      %492 = vmatpush.msra.mxu0 %v326
      %493 = vmatpush.msra.mxu0 %v384
      %494 = vmatpush.msra.mxu0 %v370
      %495 = vmatpush.msra.mxu0 %v356
      %496 = vmatpush.msra.mxu0 %v342
      %497 = vmatmul.f32.gmra.mxu0 %v453
      %v498 = vpop.f32.mrf.mxu0
      %v499 = vadd.f32 %v444, %v498
      %500 = vmatmul.f32.gmra.mxu0 %v456
      %v501 = vpop.f32.mrf.mxu0
      %v502 = vadd.f32 %v449, %v501
      %503 = vdwg.mxu0
      %v504 = vmax.f32 %v476, 0.0
      %v505 = vmax.f32 %v499, 0.0
      %v506 = vmax.f32 %v479, 0.0
      %v507 = vmax.f32 %v502, 0.0
      %508 = vst [vmem:[%s251] sm:$0xff] %v504
      %509 = vst [vmem:[%s251 + $0x8] sm:$0xff] %v505
      %510 = vst [vmem:[%s251 + $0x10] sm:$0xff] %v506
      %511 = vst [vmem:[%s251 + $0x18] sm:$0xff] %v507
      %p512 = scmp.lt.s32.totalorder %s17, 1
      %s513 = scalar_select %p512, %s17, 1
      %s514 = smul.addr %s513, 4
      %s515 = smul.addr %s514, 8
      %s516 = scalar_lea.vmem %s6, %s515
      // Predicated region
      $region45: #{fire_forward.1} parent=43 // pred_check
        %p517 = pneg %p166
      $region46: #{fire_forward.1} parent=43 // pred_check_branch
        %519 = sbr.rel (%p517) target = $region48
      $region47: #{fire_forward.1} parent=43 // pred_region
        _
      $region48: #{fire_forward.1} parent=43 // pred_fallthru
        _
    $region44: #{fire_forward.1} parent=5 // pred_fallthru
      _
    %p520 = scmp.le.s32.totalorder 2, %s12
    // Predicated region
    $region49: #{fire_forward.1} parent=5 // pred_check
      %p521 = pneg %p520
    $region50: #{fire_forward.1} parent=5 // pred_check_branch
      %523 = sbr.rel (%p521) target = $region52
    $region51: #{fire_forward.1} parent=5 // pred_region
      %s524 = ssub.s32 %s12, 2
      // Predicated region
      $region53: #{fire_forward.1} parent=51 // pred_check
        %p525 = pneg %p172
      $region54: #{fire_forward.1} parent=51 // pred_check_branch
        %527 = sbr.rel (%p525) target = $region56
      $region55: #{fire_forward.1} parent=51 // pred_region
        %p528 = scmp.lt.s32.totalorder %s18, 1
        %s529 = scalar_select %p528, %s18, 1
        %s530 = smul.addr %s529, 4
        %s531 = smul.addr %s530, 8
        %s532 = scalar_lea.vmem %s6, %s531
      $region56: #{fire_forward.1} parent=51 // pred_fallthru
        _
    $region52: #{fire_forward.1} parent=5 // pred_fallthru
      _
  $region6: #{fire_forward.1} parent=0 // loop_footer
    %s16 = sadd.s32 1, %s12
  $region7: #{fire_forward.1} parent=0 // loop_footer_branch
    %11 = sbr.rel target = $region3
  $region8: #{fire_forward.1} parent=0 // loop_exit
    _

</llo_original>
